<compile_context>
chip_gen: v7x
topology: tpu7x:2x2x1
jax: 0.10.0
libtpu: 0.0.40
codegen_flags: <defaults>
</compile_context>

<pallas_src>
import jax
import jax.numpy as jnp
from jax.experimental import pallas as pl
from jax.experimental.pallas import tpu as pltpu


def _round_up(x, m):
    return ((x + m - 1) // m) * m


def _pick_tile(dim, cap):
    """dim is a multiple of 128. Largest multiple of 128 dividing dim, <= cap.

    Prefers a 256-granular tile (v6e/v7x MXU is 2x256x256) unless it is much
    smaller than the best 128-granular choice.
    """
    cap = max(128, min(cap, dim))
    best128 = 128  # 128 always divides the (padded) dim
    t = (cap // 128) * 128
    while t >= 128:
        if dim % t == 0:
            best128 = t
            break
        t -= 128
    if best128 % 256 == 0:
        return best128
    best256 = 0
    t = (cap // 256) * 256
    while t >= 256:
        if dim % t == 0:
            best256 = t
            break
        t -= 256
    if best256 and best256 >= best128 // 2:
        return best256
    return best128


_SQRT_HALF = 0.7071067811865476


def _gelu_exact(y):
    # PyTorch nn.GELU() default = exact erf-based GELU (computed in f32).
    return 0.5 * y * (1.0 + jax.lax.erf(y * jnp.float32(_SQRT_HALF)))


def mlp_kernel_f32out(x_ref, w_ref, b_ref, o_ref):
    """f32 output: accumulate directly into o_ref (block resident across k)."""
    k = pl.program_id(2)

    @pl.when(k == 0)
    def _():
        o_ref[...] = jnp.zeros_like(o_ref)

    o_ref[...] += jnp.dot(x_ref[...], w_ref[...], preferred_element_type=jnp.float32)

    @pl.when(k == pl.num_programs(2) - 1)
    def _():
        o_ref[...] = _gelu_exact(o_ref[...] + b_ref[...])


def mlp_kernel_acc(x_ref, w_ref, b_ref, o_ref, acc_ref):
    """Low-precision output: f32 VMEM accumulator, cast only in the finalize step."""
    k = pl.program_id(2)

    @pl.when(k == 0)
    def _():
        acc_ref[...] = jnp.zeros_like(acc_ref)

    acc_ref[...] += jnp.dot(x_ref[...], w_ref[...], preferred_element_type=jnp.float32)

    @pl.when(k == pl.num_programs(2) - 1)
    def _():
        o_ref[...] = _gelu_exact(acc_ref[...] + b_ref[...]).astype(o_ref.dtype)


def mlp_forward(x, w_t, b, *, use_bf16=True, tile_m=None, tile_n=None, tile_k=None,
                weight_buffers=2, out_dtype=None):
    """x: (B, n_in); w_t: (n_in, n_out) = weight.T; b: (n_out,) or (1, n_out)."""
    B, n_in = x.shape
    assert w_t.shape[0] == n_in, "w_t must be the transposed Linear weight (n_in, n_out)"
    n_out = w_t.shape[1]
    out_dtype = jnp.dtype(x.dtype) if out_dtype is None else jnp.dtype(out_dtype)

    # ---- hardware-aware tile caps and VMEM budget ----
    try:
        vmem_cap = int(pltpu.get_tpu_info().vmem_capacity_bytes)
    except Exception:  # conservative default = v7x per-TC VMEM
        vmem_cap = 64 * 1024 * 1024
    big_vmem = vmem_cap >= 100 * 1024 * 1024  # v5e/v6e (128 MiB) vs v7x (64 MiB)
    if tile_m is None:
        tile_m = 512
    if tile_n is None:
        tile_n = 2048 if big_vmem else 1024
    if tile_k is None:
        tile_k = 2048 if big_vmem else 1024
    vmem_limit = min(int(0.75 * vmem_cap), 96 * 1024 * 1024)

    in_dtype = jnp.bfloat16 if use_bf16 else jnp.float32

    # ---- pad feature dims to multiples of 128: lane-dense tiles, bounded VMEM ----
    n_in_p = _round_up(n_in, 128)
    n_out_p = _round_up(n_out, 128)

    xp = jnp.pad(x, ((0, 0), (0, n_in_p - n_in))) if n_in_p != n_in else x
    wp = w_t
    if n_in_p != n_in or n_out_p != n_out:
        wp = jnp.pad(w_t, ((0, n_in_p - n_in), (0, n_out_p - n_out)))
    b32 = jnp.asarray(b, jnp.float32).reshape(1, n_out)
    if n_out_p != n_out:
        b32 = jnp.pad(b32, ((0, 0), (0, n_out_p - n_out)))

    # ---- batch tiling: bf16 packs 16 rows per vreg -> round the batch to 16 ----
    tm = min(tile_m, _round_up(B, 16))
    Bp = _round_up(B, tm)
    if Bp != B:
        xp = jnp.pad(xp, ((0, Bp - B), (0, 0)))

    # Feed the MXU low-precision operands; accumulation stays f32.
    xp = xp.astype(in_dtype)
    wp = wp.astype(in_dtype)

    tn = _pick_tile(n_out_p, tile_n)
    tk = _pick_tile(n_in_p, tile_k)

    # Megacore (v7x has 2 TCs): guarantee >= 2 steps on the parallel grid axes.
    if (Bp // tm) * (n_out_p // tn) == 1:
        if tn % 256 == 0:
            tn //= 2
        elif tm >= 16 and tm % 16 == 0:
            tm //= 2

    grid_m, grid_n, grid_k = Bp // tm, n_out_p // tn, n_in_p // tk
    grid = (grid_m, grid_n, grid_k)

    in_itemsize = jnp.dtype(in_dtype).itemsize
    out_itemsize = out_dtype.itemsize
    cost = pl.CostEstimate(
        flops=2 * Bp * n_in_p * n_out_p + 8 * Bp * n_out_p,   # matmul + GELU epilogue
        transcendentals=Bp * n_out_p,                         # erf
        bytes_accessed=(
            xp.size * in_itemsize * grid_n        # x re-streamed once per N tile
            + wp.size * in_itemsize * grid_m      # W re-streamed once per M tile
            + b32.size * 4 * grid_m
            + Bp * n_out_p * out_itemsize
        ),
    )

    w_spec_kwargs = {}
    if weight_buffers != 2:
        # Deeper weight buffering for bandwidth-poor parts (v5e) on mem-bound shapes.
        w_spec_kwargs["pipeline_mode"] = pl.Buffered(weight_buffers)

    in_specs = [
        pl.BlockSpec((tm, tk), lambda i, j, k: (i, k)),                   # x tile
        pl.BlockSpec((tk, tn), lambda i, j, k: (k, j), **w_spec_kwargs),  # W tile (streamed)
        pl.BlockSpec((1, tn), lambda i, j, k: (0, j)),                    # f32 bias tile
    ]
    out_spec = pl.BlockSpec((tm, tn), lambda i, j, k: (i, j))

    if out_dtype == jnp.float32:
        kernel, scratch = mlp_kernel_f32out, []        # accumulate in the output block
    else:
        kernel, scratch = mlp_kernel_acc, [pltpu.VMEM((tm, tn), jnp.float32)]

    out = pl.pallas_call(
        kernel,
        out_shape=jax.ShapeDtypeStruct((Bp, n_out_p), out_dtype),
        grid_spec=pltpu.PrefetchScalarGridSpec(
            num_scalar_prefetch=0,
            grid=grid,
            in_specs=in_specs,
            out_specs=out_spec,
            scratch_shapes=scratch,
        ),
        compiler_params=pltpu.CompilerParams(
            dimension_semantics=("parallel", "parallel", "arbitrary"),
            vmem_limit_bytes=vmem_limit,
        ),
        cost_estimate=cost,
    )(xp, wp, b32)

    if Bp != B or n_out_p != n_out:
        out = out[:B, :n_out]
    return out


if __name__ == "__main__":
    # Small shapes consistent with MLP(n_in, n_out): batch=16, n_in=32, n_out=128.
    B, n_in, n_out = 16, 32, 128

    key = jax.random.PRNGKey(0)
    kx, kw, kb = jax.random.split(key, 3)

    x = jax.random.normal(kx, (B, n_in), dtype=jnp.float32)

    # PyTorch Linear-style uniform init, weight stored as (n_out, n_in).
    bound = 1.0 / (n_in ** 0.5)
    w = jax.random.uniform(kw, (n_out, n_in), dtype=jnp.float32, minval=-bound, maxval=bound)
    b = jax.random.uniform(kb, (n_out,), dtype=jnp.float32, minval=-bound, maxval=bound)

    out = mlp_forward(x, w.T, b)
    out = jax.block_until_ready(out)
    assert out.shape == (B, n_out)

    # Tight reference using the same bf16 operand rounding (f32 accumulation).
    xb = x.astype(jnp.bfloat16).astype(jnp.float32)
    wb = w.astype(jnp.bfloat16).astype(jnp.float32)
    ref_bf16 = jax.nn.gelu(xb @ wb.T + b, approximate=False)
    assert jnp.allclose(out, ref_bf16, atol=1e-4, rtol=1e-4)

    # Loose check against the exact f32 MLP (bf16 operands -> ~1e-2 rel error).
    ref_f32 = jax.nn.gelu(x @ w.T + b, approximate=False)
    assert jnp.allclose(out, ref_f32, atol=2e-2, rtol=2e-2)

    print("KERNEL_OK")
</pallas_src>

<mosaic_0001>
module attributes {stable_mosaic.version = 11 : i64} {
  func.func @mlp_kernel_f32out(%arg0: i32, %arg1: i32, %arg2: i32, %arg3: memref<8x128xbf16, #tpu.memory_space<vmem>>, %arg4: memref<128x128xbf16, #tpu.memory_space<vmem>>, %arg5: memref<1x128xf32, #tpu.memory_space<vmem>>, %arg6: memref<8x128xf32, #tpu.memory_space<vmem>>) attributes {dimension_semantics = [#tpu.dimension_semantics<parallel>, #tpu.dimension_semantics<parallel>, #tpu.dimension_semantics<arbitrary>], iteration_bounds = array<i64: 2, 1, 1>, scalar_prefetch = 0 : i64, scratch_operands = 0 : i64, tpu.core_type = #tpu.core_type<tc>, window_params = [{transform_indices = @transform_0, window_bounds = array<i64: 8, 128>}, {transform_indices = @transform_1, window_bounds = array<i64: 128, 128>}, {transform_indices = @transform_2, window_bounds = array<i64: 1, 128>}, {transform_indices = @transform_3, window_bounds = array<i64: 8, 128>}]} {
    %c0_i32 = arith.constant 0 : i32
    %0 = arith.cmpi eq, %arg2, %c0_i32 : i32
    %1 = arith.extui %0 : i1 to i32
    %c0_i32_0 = arith.constant 0 : i32
    %2 = arith.cmpi ne, %1, %c0_i32_0 : i32
    scf.if %2 {
      %cst_10 = arith.constant 0.000000e+00 : f32
      %12 = vector.broadcast %cst_10 : f32 to vector<8x128xf32>
      %c0_11 = arith.constant 0 : index
      %c0_12 = arith.constant 0 : index
      %13 = vector.load %arg6[%c0_11, %c0_12] : memref<8x128xf32, #tpu.memory_space<vmem>>, vector<8x128xf32>
      tpu.vector_store %arg6[%c0_11, %c0_12], %12 {strides = array<i32>} : memref<8x128xf32, #tpu.memory_space<vmem>>, vector<8x128xf32>,
    } else {
    }
    %c0 = arith.constant 0 : index
    %c0_1 = arith.constant 0 : index
    %3 = vector.load %arg6[%c0, %c0_1] : memref<8x128xf32, #tpu.memory_space<vmem>>, vector<8x128xf32>
    %c0_2 = arith.constant 0 : index
    %c0_3 = arith.constant 0 : index
    %4 = vector.load %arg3[%c0_2, %c0_3] : memref<8x128xbf16, #tpu.memory_space<vmem>>, vector<8x128xbf16>
    %c0_4 = arith.constant 0 : index
    %c0_5 = arith.constant 0 : index
    %5 = vector.load %arg4[%c0_4, %c0_5] : memref<128x128xbf16, #tpu.memory_space<vmem>>, vector<128x128xbf16>
    %cst = arith.constant dense<0.000000e+00> : vector<8x128xf32>
    %6 = tpu.matmul %4, %5, %cst {dimension_numbers = #tpu.dot_dimension_numbers<[1], [0], [0], [1], [0, 0, 1, 1], [], []>} : vector<8x128xbf16>, vector<128x128xbf16>, vector<8x128xf32> -> vector<8x128xf32>
    %7 = arith.addf %3, %6 : vector<8x128xf32>
    %c0_6 = arith.constant 0 : index
    %c0_7 = arith.constant 0 : index
    %8 = vector.load %arg6[%c0_6, %c0_7] : memref<8x128xf32, #tpu.memory_space<vmem>>, vector<8x128xf32>
    tpu.vector_store %arg6[%c0_6, %c0_7], %7 {strides = array<i32>} : memref<8x128xf32, #tpu.memory_space<vmem>>, vector<8x128xf32>,
    %c0_i32_8 = arith.constant 0 : i32
    %9 = arith.cmpi eq, %arg2, %c0_i32_8 : i32
    %10 = arith.extui %9 : i1 to i32
    %c0_i32_9 = arith.constant 0 : i32
    %11 = arith.cmpi ne, %10, %c0_i32_9 : i32
    scf.if %11 {
      %c0_10 = arith.constant 0 : index
      %c0_11 = arith.constant 0 : index
      %12 = vector.load %arg6[%c0_10, %c0_11] : memref<8x128xf32, #tpu.memory_space<vmem>>, vector<8x128xf32>
      %c0_12 = arith.constant 0 : index
      %c0_13 = arith.constant 0 : index
      %13 = vector.load %arg5[%c0_12, %c0_13] : memref<1x128xf32, #tpu.memory_space<vmem>>, vector<1x128xf32>
      %14 = vector.broadcast %13 : vector<1x128xf32> to vector<8x128xf32>
      %15 = arith.addf %12, %14 : vector<8x128xf32>
      %cst_14 = arith.constant 5.000000e-01 : f32
      %16 = vector.broadcast %cst_14 : f32 to vector<8x128xf32>
      %17 = arith.mulf %16, %15 : vector<8x128xf32>
      %cst_15 = arith.constant 0.707106769 : f32
      %18 = vector.broadcast %cst_15 : f32 to vector<8x128xf32>
      %19 = arith.mulf %15, %18 : vector<8x128xf32>
      %20 = math.erf %19 : vector<8x128xf32>
      %cst_16 = arith.constant 1.000000e+00 : f32
      %21 = vector.broadcast %cst_16 : f32 to vector<8x128xf32>
      %22 = arith.addf %21, %20 : vector<8x128xf32>
      %23 = arith.mulf %17, %22 : vector<8x128xf32>
      %c0_17 = arith.constant 0 : index
      %c0_18 = arith.constant 0 : index
      %24 = vector.load %arg6[%c0_17, %c0_18] : memref<8x128xf32, #tpu.memory_space<vmem>>, vector<8x128xf32>
      tpu.vector_store %arg6[%c0_17, %c0_18], %23 {strides = array<i32>} : memref<8x128xf32, #tpu.memory_space<vmem>>, vector<8x128xf32>,
    } else {
    }
    return
  }
  func.func @transform_0(%arg0: i32, %arg1: i32, %arg2: i32) -> (i32, i32) {
    %c0_i32 = arith.constant 0 : i32
    return %arg0, %arg2 : i32, i32
  }
  func.func @transform_1(%arg0: i32, %arg1: i32, %arg2: i32) -> (i32, i32) {
    %c0_i32 = arith.constant 0 : i32
    return %arg2, %arg1 : i32, i32
  }
  func.func @transform_2(%arg0: i32, %arg1: i32, %arg2: i32) -> (i32, i32) {
    %c0_i32 = arith.constant 0 : i32
    %c0_i32_0 = arith.constant 0 : i32
    return %c0_i32, %arg1 : i32, i32
  }
  func.func @transform_3(%arg0: i32, %arg1: i32, %arg2: i32) -> (i32, i32) {
    %c0_i32 = arith.constant 0 : i32
    return %arg0, %arg1 : i32, i32
  }
}

</mosaic_0001>

<llo_original>
// kernel: tpu_custom_call.1
$region0: #{tpu_custom_call.1}
  #allocation0 [shape = 'u32[]', space=smem, size = 0x4, offset = 0x4, fixed_abs, tag = 'smem constant byte address 0x4 - core index']
  #allocation1 [shape = 'u32[144,128]{1,0:T(1,128)}', space=vmem, size = 0x12000, scoped, tag = 'internal scratch']
  %s0 = inlined_call_operand.hbm [shape: bf16[16,128], index: 0, kind: input, shape index: {}]
  %s1 = inlined_call_operand.hbm [shape: bf16[128,128], index: 1, kind: input, shape index: {}]
  %s2 = inlined_call_operand.vmem [shape: f32[1,128], index: 2, kind: input, shape index: {}]
  %s3 = inlined_call_operand.hbm [shape: f32[16,128], index: 3, kind: output, shape index: {}]
  %s4 = sld [smem:[#allocation0]]
  $region61: #{tpu_custom_call.1} parent=0
    _
  %s6 = ssub.s32 1, %s4
  %s7 = scalar_select 0, %s6, %s4
  $region1: #{tpu_custom_call.1} parent=0
    #allocation2 [shape = 'u8[4096]{0}', space=vmem, size = 0x1000, scoped, tag = 'input window, operand 0']
    #allocation3 [shape = 's32[2]{0}', space=sflag, size = 0x8, scoped, tag = 'scoped memory for tpu_custom_call.1']
    #allocation4 [shape = 's32[2]{0}', space=sflag, size = 0x8, scoped, tag = 'scoped memory for tpu_custom_call.1']
    #allocation5 [shape = 'u8[32768]{0}', space=vmem, size = 0x8000, scoped, tag = 'input window, operand 1, single buffered']
    #allocation6 [shape = 's32[1]{0}', space=sflag, size = 0x4, scoped, tag = 'scoped memory for tpu_custom_call.1']
    #allocation7 [shape = 'u8[8192]{0}', space=vmem, size = 0x2000, scoped, tag = 'output window, operand 0']
    %8 = vsyncpa [#allocation3], 0
    %s9 = scalar_lea.sflag [#allocation3], 1
    %10 = vsyncpa %s9, 0
    %11 = vsyncpa [#allocation6], 0
    %12 = vsyncpa [#allocation4], 0
    %s13 = scalar_lea.sflag [#allocation4], 1
    %14 = vsyncpa %s13, 0
    loop: start=0, step=1, limit=4
    $region2: #{tpu_custom_call.1} parent=1 // loop_pre_header
      _
    $region3: #{tpu_custom_call.1} parent=1 // loop_header
      %s16 = sphi 0, %s20
      %p17 = scmp.ge.s32.totalorder %s16, 4
      %s23 = sphi 0, %s42
      %s24 = sphi 0, %s38
      %s25 = sphi 0, %s34
      %s26 = sphi 0, %s23
      %s27 = sphi 0, %s24
      %s28 = sphi 0, %s25
      %s29 = sphi 0, %s26
      %s30 = sphi 0, %s27
      %s31 = sphi 0, %s28
      %s47 = sphi 0, %s49
      %s50 = sphi 0, %s47
      %s51 = sphi 0, %s50
      %s67 = sphi 0, %s51
      %s75 = sphi 0, %s77
      %s78 = sphi 0, %s75
      %s79 = sphi 0, %s78
      %s95 = sphi 0, %s79
      %s101 = sphi 0, %s103
      %s104 = sphi 0, %s101
      %s105 = sphi 0, %s104
      %s121 = sphi 0, %s105
      %s129 = sphi 0, %s131
      %s132 = sphi 0, %s129
      %s133 = sphi 0, %s132
      %s149 = sphi 0, %s133
    $region4: #{tpu_custom_call.1} parent=1 // loop_header_branch
      %19 = sbr.rel (%p17) target = $region8
    $region5: #{tpu_custom_call.1} parent=1 // loop_body
      %s21 = ssub.s32 %s16, 1
      %s22 = ssub.s32 %s16, 2
      %s32 = sadd.s32 1, %s25
      %p33 = scmp.ge.s32.totalorder %s32, 1
      %s34 = scalar_select %p33, 0, %s32
      %s35 = sadd.s32 1, %s24
      %s36 = scalar_select %p33, %s35, %s24
      %p37 = scmp.ge.s32.totalorder %s36, 1
      %s38 = scalar_select %p37, 0, %s36
      %s39 = sadd.s32 1, %s23
      %s40 = scalar_select %p37, %s39, %s23
      %p41 = scmp.ge.s32.totalorder %s40, 2
      %s42 = scalar_select %p41, 0, %s40
      %s43 = ssub.s32 %s23, %s42
      %s44 = ssub.s32 %s25, %s34
      %s45 = sor.u32 %s43, %s44
      %p46 = scmp.eq.s32.totalorder %s45, 0
      %s48 = sadd.s32 %s47, 1
      %s49 = scalar_select %p46, %s47, %s48
      %p52 = pneg %p46
      %p53 = scmp.eq.s32.totalorder %s16, 1
      %p54 = por %p52, %p53
      %p55 = scmp.ne.s32.totalorder %s47, %s50
      %p56 = scmp.eq.s32.totalorder %s16, 0
      %p57 = por %p55, %p56
      %p58 = scmp.ne.s32.totalorder %s47, %s50
      %p59 = scmp.eq.s32.totalorder %s21, 1
      %p60 = por %p58, %p59
      %p61 = scmp.ne.s32.totalorder %s50, %s51
      %p62 = scmp.eq.s32.totalorder %s21, 0
      %p63 = por %p61, %p62
      %p64 = scmp.ne.s32.totalorder %s50, %s51
      %p65 = scmp.eq.s32.totalorder %s22, 1
      %p66 = por %p64, %p65
      %p68 = scmp.ne.s32.totalorder %s51, %s67
      %p69 = scmp.eq.s32.totalorder %s22, 0
      %p70 = por %p68, %p69
      %s71 = ssub.s32 %s25, %s34
      %s72 = ssub.s32 %s24, %s38
      %s73 = sor.u32 %s71, %s72
      %p74 = scmp.eq.s32.totalorder %s73, 0
      %s76 = sadd.s32 %s75, 1
      %s77 = scalar_select %p74, %s75, %s76
      %p80 = pneg %p74
      %p81 = scmp.eq.s32.totalorder %s16, 1
      %p82 = por %p80, %p81
      %p83 = scmp.ne.s32.totalorder %s75, %s78
      %p84 = scmp.eq.s32.totalorder %s16, 0
      %p85 = por %p83, %p84
      %p86 = scmp.ne.s32.totalorder %s75, %s78
      %p87 = scmp.eq.s32.totalorder %s21, 1
      %p88 = por %p86, %p87
      %p89 = scmp.ne.s32.totalorder %s78, %s79
      %p90 = scmp.eq.s32.totalorder %s21, 0
      %p91 = por %p89, %p90
      %p92 = scmp.ne.s32.totalorder %s78, %s79
      %p93 = scmp.eq.s32.totalorder %s22, 1
      %p94 = por %p92, %p93
      %p96 = scmp.ne.s32.totalorder %s79, %s95
      %p97 = scmp.eq.s32.totalorder %s22, 0
      %p98 = por %p96, %p97
      %s99 = ssub.s32 %s24, %s38
      %p100 = scmp.eq.s32.totalorder %s99, 0
      %s102 = sadd.s32 %s101, 1
      %s103 = scalar_select %p100, %s101, %s102
      %p106 = pneg %p100
      %p107 = scmp.eq.s32.totalorder %s16, 1
      %p108 = por %p106, %p107
      %p109 = scmp.ne.s32.totalorder %s101, %s104
      %p110 = scmp.eq.s32.totalorder %s16, 0
      %p111 = por %p109, %p110
      %p112 = scmp.ne.s32.totalorder %s101, %s104
      %p113 = scmp.eq.s32.totalorder %s21, 1
      %p114 = por %p112, %p113
      %p115 = scmp.ne.s32.totalorder %s104, %s105
      %p116 = scmp.eq.s32.totalorder %s21, 0
      %p117 = por %p115, %p116
      %p118 = scmp.ne.s32.totalorder %s104, %s105
      %p119 = scmp.eq.s32.totalorder %s22, 1
      %p120 = por %p118, %p119
      %p122 = scmp.ne.s32.totalorder %s105, %s121
      %p123 = scmp.eq.s32.totalorder %s22, 0
      %p124 = por %p122, %p123
      %s125 = ssub.s32 %s23, %s42
      %s126 = ssub.s32 %s24, %s38
      %s127 = sor.u32 %s125, %s126
      %p128 = scmp.eq.s32.totalorder %s127, 0
      %s130 = sadd.s32 %s129, 1
      %s131 = scalar_select %p128, %s129, %s130
      %p134 = pneg %p128
      %p135 = scmp.eq.s32.totalorder %s16, 1
      %p136 = por %p134, %p135
      %p137 = scmp.ne.s32.totalorder %s129, %s132
      %p138 = scmp.eq.s32.totalorder %s16, 0
      %p139 = por %p137, %p138
      %p140 = scmp.ne.s32.totalorder %s129, %s132
      %p141 = scmp.eq.s32.totalorder %s21, 1
      %p142 = por %p140, %p141
      %p143 = scmp.ne.s32.totalorder %s132, %s133
      %p144 = scmp.eq.s32.totalorder %s21, 0
      %p145 = por %p143, %p144
      %p146 = scmp.ne.s32.totalorder %s132, %s133
      %p147 = scmp.eq.s32.totalorder %s22, 1
      %p148 = por %p146, %p147
      %p150 = scmp.ne.s32.totalorder %s133, %s149
      %p151 = scmp.eq.s32.totalorder %s22, 0
      %p152 = por %p150, %p151
      %p153 = scmp.le.s32.totalorder 1, %s16
      %p154 = scmp.lt.s32.totalorder %s16, 3
      %p155 = pnand %p153, %p154
      %p156 = pneg %p155
      // Predicated region
      $region9: #{tpu_custom_call.1} parent=5 // pred_check
        _
      $region10: #{tpu_custom_call.1} parent=5 // pred_check_branch
        %158 = sbr.rel (%p155) target = $region12
      $region11: #{tpu_custom_call.1} parent=5 // pred_region
        %s159 = ssub.s32 %s16, 1
        // Predicated region
        $region13: #{tpu_custom_call.1} parent=11 // pred_check
          %p160 = pneg %p91
        $region14: #{tpu_custom_call.1} parent=11 // pred_check_branch
          %162 = sbr.rel (%p160) target = $region16
        $region15: #{tpu_custom_call.1} parent=11 // pred_region
          %s163 = smul.u32 16, %s28
          %s165 = ssub.s32 1024, 1024
          %166 = vsyncadd [#allocation6], %s165
          %s167 = sadd.s32 %s27, %s163
          %s168 = smul.addr %s167, 64
          %s169 = scalar_lea.hbm %s1, %s168
          %s170 = sshll.u32 [#allocation5], 4
          %s171 = int_to_ptr.vmem [resolvable:$true] %s170
          %176 = dma.hbm_to_vmem [thread:$0]  %s169, 1024, %s171, [#allocation6], 64, 64, 4
        $region16: #{tpu_custom_call.1} parent=11 // pred_fallthru
          _
        // Predicated region
        $region17: #{tpu_custom_call.1} parent=11 // pred_check
          %p177 = pneg %p117
        $region18: #{tpu_custom_call.1} parent=11 // pred_check_branch
          %179 = sbr.rel (%p177) target = $region20
        $region19: #{tpu_custom_call.1} parent=11 // pred_region
          %p180 = scmp.lt.s32.totalorder %s27, 0
          %s181 = scalar_select %p180, %s27, 0
          %s182 = scalar_lea.vmem %s2, %s181
        $region20: #{tpu_custom_call.1} parent=11 // pred_fallthru
          _
      $region12: #{tpu_custom_call.1} parent=5 // pred_fallthru
        _
      %p183 = scmp.lt.s32.totalorder %s16, 2
      // Predicated region
      $region21: #{tpu_custom_call.1} parent=5 // pred_check
        %p184 = pneg %p183
      $region22: #{tpu_custom_call.1} parent=5 // pred_check_branch
        %186 = sbr.rel (%p184) target = $region24
      $region23: #{tpu_custom_call.1} parent=5 // pred_region
        // Predicated region
        $region25: #{tpu_custom_call.1} parent=23 // pred_check
          %p187 = pneg %p57
        $region26: #{tpu_custom_call.1} parent=23 // pred_check_branch
          %189 = sbr.rel (%p187) target = $region28
        $region27: #{tpu_custom_call.1} parent=23 // pred_region
          %s190 = sand.u32 %s47, 1
          %s191 = scalar_lea.sflag [#allocation3], %s190
          %s192 = sand.u32 %s47, 1
          %s193 = smul.addr %s192, 4
          %s194 = scalar_lea.vmem [#allocation2], %s193
          %s196 = ssub.s32 64, 64
          %197 = vsyncadd %s191, %s196
          %s198 = sadd.s32 %s25, %s23
          %s199 = smul.addr %s198, 64
          %s200 = scalar_lea.hbm %s0, %s199
          %s202 = sshll.u32 %s194, 4
          %s203 = int_to_ptr.vmem [resolvable:$true] %s202
          %205 = dma.hbm_to_vmem [thread:$0]  %s200, 64, %s203, %s191
        $region28: #{tpu_custom_call.1} parent=23 // pred_fallthru
          _
      $region24: #{tpu_custom_call.1} parent=5 // pred_fallthru
        _
      %p206 = scmp.le.s32.totalorder 1, %s16
      %p207 = scmp.lt.s32.totalorder %s16, 3
      %p208 = pnand %p206, %p207
      %p209 = pneg %p208
      // Predicated region
      $region29: #{tpu_custom_call.1} parent=5 // pred_check
        _
      $region30: #{tpu_custom_call.1} parent=5 // pred_check_branch
        %211 = sbr.rel (%p208) target = $region32
      $region31: #{tpu_custom_call.1} parent=5 // pred_region
        %s212 = ssub.s32 %s16, 1
        %s213 = sand.u32 %s50, 1
        %s214 = scalar_lea.sflag [#allocation3], %s213
        %s215 = sand.u32 %s50, 1
        %s216 = smul.addr %s215, 4
        %s217 = scalar_lea.vmem [#allocation2], %s216
        // Predicated region
        $region33: #{tpu_custom_call.1} parent=31 // pred_check
          %p218 = pneg %p63
        $region34: #{tpu_custom_call.1} parent=31 // pred_check_branch
          %220 = sbr.rel (%p218) target = $region36
        $region35: #{tpu_custom_call.1} parent=31 // pred_region
          %221 = dma.done %s214, 64
        $region36: #{tpu_custom_call.1} parent=31 // pred_fallthru
          _
        // Predicated region
        $region37: #{tpu_custom_call.1} parent=31 // pred_check
          %p222 = pneg %p91
        $region38: #{tpu_custom_call.1} parent=31 // pred_check_branch
          %224 = sbr.rel (%p222) target = $region40
        $region39: #{tpu_custom_call.1} parent=31 // pred_region
          %225 = dma.done [#allocation6], 1024
        $region40: #{tpu_custom_call.1} parent=31 // pred_fallthru
          _
        %s226 = sand.u32 %s50, 1
        %s227 = scalar_lea.sflag [#allocation3], %s226
        %s228 = sand.u32 %s50, 1
        %s229 = smul.addr %s228, 4
        %s230 = scalar_lea.vmem [#allocation2], %s229
        %p231 = pneg %p63
        %p232 = pneg %p60
        %p233 = pneg %p91
        %p234 = pneg %p88
        %p235 = scmp.lt.s32.totalorder %s27, 0
        %s236 = scalar_select %p235, %s27, 0
        %s237 = scalar_lea.vmem %s2, %s236
        %p238 = pneg %p117
        %p239 = pneg %p114
        %p240 = pneg %p145
        %p241 = pneg %p142
        %s242 = sand.u32 %s132, 1
        %s243 = scalar_lea.sflag [#allocation4], %s242
        %s244 = sand.u32 %s132, 1
        %s245 = smul.addr %s244, 8
        %s246 = scalar_lea.vmem [#allocation7], %s245
        %s247 = smul.u32 16, %s28
        %p248 = scmp.lt.s32.totalorder %s27, 0
        %s249 = scalar_select %p248, %s27, 0
        %s250 = scalar_lea.vmem %s2, %s249
        %p252 = scmp.eq.s32.totalorder %s28, 0
        // Predicated region
        $region41: #{tpu_custom_call.1} parent=31 // pred_check
          %p253 = pneg %p252
        $region42: #{tpu_custom_call.1} parent=31 // pred_check_branch
          %255 = sbr.rel (%p253) target = $region44
        $region43: #{tpu_custom_call.1} parent=31 // pred_region
          %256 = vst [vmem:[%s246] sm:$0xff] 0.0
        $region44: #{tpu_custom_call.1} parent=31 // pred_fallthru
          _
        %v257 = vld [vmem:[%s246] sm:$0xff]
        %v258 = vld [vmem:[%s217] sm:$0xf]
        %v259 = vld [vmem:[#allocation5] sm:$0xf]
        %v260 = vld [vmem:[#allocation5 + $0x4] sm:$0xf]
        %v261 = vld [vmem:[#allocation5 + $0x8] sm:$0xf]
        %v262 = vld [vmem:[#allocation5 + $0xc] sm:$0xf]
        %v263 = vld [vmem:[#allocation5 + $0x10] sm:$0xf]
        %v264 = vld [vmem:[#allocation5 + $0x14] sm:$0xf]
        %v265 = vld [vmem:[#allocation5 + $0x18] sm:$0xf]
        %v266 = vld [vmem:[#allocation5 + $0x1c] sm:$0xf]
        %v267 = vld [vmem:[#allocation5 + $0x20] sm:$0xf]
        %v268 = vld [vmem:[#allocation5 + $0x24] sm:$0xf]
        %v269 = vld [vmem:[#allocation5 + $0x28] sm:$0xf]
        %v270 = vld [vmem:[#allocation5 + $0x2c] sm:$0xf]
        %v271 = vld [vmem:[#allocation5 + $0x30] sm:$0xf]
        %v272 = vld [vmem:[#allocation5 + $0x34] sm:$0xf]
        %v273 = vld [vmem:[#allocation5 + $0x38] sm:$0xf]
        %v274 = vld [vmem:[#allocation5 + $0x3c] sm:$0xf]
        %v291 = vunpack.c.l.b16 %v259
        %v292 = vunpack.c.l.b16 %v260
        %v293 = vunpack.c.l.b16 %v261
        %v294 = vunpack.c.l.b16 %v262
        %v295 = vunpack.c.l.b16 %v263
        %v296 = vunpack.c.l.b16 %v264
        %v297 = vunpack.c.l.b16 %v265
        %v298 = vunpack.c.l.b16 %v266
        %v299 = vunpack.c.l.b16 %v267
        %v300 = vunpack.c.l.b16 %v268
        %v301 = vunpack.c.l.b16 %v269
        %v302 = vunpack.c.l.b16 %v270
        %v303 = vunpack.c.l.b16 %v271
        %v304 = vunpack.c.l.b16 %v272
        %v305 = vunpack.c.l.b16 %v273
        %v306 = vunpack.c.l.b16 %v274
        %v307 = vpack.c.b16 %v292, %v291
        %v308 = vpack.c.b16 %v294, %v293
        %v309 = vpack.c.b16 %v296, %v295
        %v310 = vpack.c.b16 %v298, %v297
        %v311 = vpack.c.b16 %v300, %v299
        %v312 = vpack.c.b16 %v302, %v301
        %v313 = vpack.c.b16 %v304, %v303
        %v314 = vpack.c.b16 %v306, %v305
        %323 = vmatprep.subr.bf16.mxu0 0
        %324 = vmatpush1.bf16.msra.mxu0 %v307
        %325 = vmatprep.subr.bf16.mxu0 0
        %326 = vmatpush1.bf16.msra.mxu0 %v308
        %327 = vmatprep.subr.bf16.mxu0 0
        %328 = vmatpush1.bf16.msra.mxu0 %v309
        %329 = vmatprep.subr.bf16.mxu0 0
        %330 = vmatpush1.bf16.msra.mxu0 %v310
        %331 = vmatprep.subr.bf16.mxu0 0
        %332 = vmatpush1.bf16.msra.mxu0 %v311
        %333 = vmatprep.subr.bf16.mxu0 0
        %334 = vmatpush1.bf16.msra.mxu0 %v312
        %335 = vmatprep.subr.bf16.mxu0 0
        %336 = vmatpush1.bf16.msra.mxu0 %v313
        %337 = vmatprep.subr.bf16.mxu0 0
        %338 = vmatpush1.bf16.msra.mxu0 %v314
        %339 = vmatprep.subr.bf16.mxu0 0
        %340 = vmatpush1.bf16.msra.mxu0 0
        %341 = vmatprep.subr.bf16.mxu0 0
        %342 = vmatpush1.bf16.msra.mxu0 0
        %343 = vmatprep.subr.bf16.mxu0 0
        %344 = vmatpush1.bf16.msra.mxu0 0
        %345 = vmatprep.subr.bf16.mxu0 0
        %346 = vmatpush1.bf16.msra.mxu0 0
        %347 = vmatprep.subr.bf16.mxu0 0
        %348 = vmatpush1.bf16.msra.mxu0 0
        %349 = vmatprep.subr.bf16.mxu0 0
        %350 = vmatpush1.bf16.msra.mxu0 0
        %351 = vmatprep.subr.bf16.mxu0 0
        %352 = vmatpush1.bf16.msra.mxu0 0
        %353 = vmatprep.subr.bf16.mxu0 0
        %354 = vmatpush1.bf16.msra.mxu0 0
        %355 = vmatprep.mubr.bf16.mxu0 0
        %356 = vmatmul.mubr.bf16.gmra.mrb[0].mxu0 %v258
        %v357 = vpop.f32.mrb[0].mxu0
        %v358 = vadd.f32 0.0, %v357
        %v359 = vpop.f32.mrb[0].mxu0
        %v360 = vpop.f32.mrb[0].mxu0
        %v361 = vpop.f32.mrb[0].mxu0
        %362 = vdwg.mxu0
        %v363 = vadd.f32 %v257, %v358
        %364 = vst [vmem:[%s246] sm:$0xff] %v363
        // Predicated region
        $region45: #{tpu_custom_call.1} parent=31 // pred_check
          %p365 = pneg %p252
        $region46: #{tpu_custom_call.1} parent=31 // pred_check_branch
          %367 = sbr.rel (%p365) target = $region48
        $region47: #{tpu_custom_call.1} parent=31 // pred_region
          %v368 = vld [vmem:[%s246] sm:$0xff]
          %v369 = vld [vmem:[%s250] sm:$0x1]
          %v371 = vlaneseq
          %v372 = vshrl.u32 %v371, 7
          %v373 = vsub.s32 0, %v372
          %v374 = vrot.slane %v369, %v373
          %v376 = vadd.f32 %v368, %v374
          %v377 = vmul.f32 %v376, 0.5
          %v378 = vmul.f32 %v376, 0.70710677
          %v379 = verf.f32.pop %v378
          %v380 = vadd.f32 %v379, 1.0
          %v381 = vmul.f32 %v377, %v380
          %382 = vst [vmem:[%s246] sm:$0xff] %v381
        $region48: #{tpu_custom_call.1} parent=31 // pred_fallthru
          _
        %s383 = sand.u32 %s132, 1
        %s384 = scalar_lea.sflag [#allocation4], %s383
        %s385 = sand.u32 %s132, 1
        %s386 = smul.addr %s385, 8
        %s387 = scalar_lea.vmem [#allocation7], %s386
        // Predicated region
        $region49: #{tpu_custom_call.1} parent=31 // pred_check
          %p388 = pneg %p142
        $region50: #{tpu_custom_call.1} parent=31 // pred_check_branch
          %390 = sbr.rel (%p388) target = $region52
        $region51: #{tpu_custom_call.1} parent=31 // pred_region
          %s392 = ssub.s32 128, 128
          %393 = vsyncadd %s384, %s392
          %s394 = sadd.s32 %s27, %s26
          %s395 = smul.addr %s394, 128
          %s396 = scalar_lea.hbm %s3, %s395
          %s398 = sshll.u32 %s387, 4
          %s399 = int_to_ptr.vmem [resolvable:$true] %s398
          %401 = dma.vmem_to_hbm [thread:$0]  %s399, 128, %s396, %s384
        $region52: #{tpu_custom_call.1} parent=31 // pred_fallthru
          _
      $region32: #{tpu_custom_call.1} parent=5 // pred_fallthru
        _
      %p402 = scmp.le.s32.totalorder 2, %s16
      // Predicated region
      $region53: #{tpu_custom_call.1} parent=5 // pred_check
        %p403 = pneg %p402
      $region54: #{tpu_custom_call.1} parent=5 // pred_check_branch
        %405 = sbr.rel (%p403) target = $region56
      $region55: #{tpu_custom_call.1} parent=5 // pred_region
        %s406 = ssub.s32 %s16, 2
        // Predicated region
        $region57: #{tpu_custom_call.1} parent=55 // pred_check
          %p407 = pneg %p148
        $region58: #{tpu_custom_call.1} parent=55 // pred_check_branch
          %409 = sbr.rel (%p407) target = $region60
        $region59: #{tpu_custom_call.1} parent=55 // pred_region
          %s410 = sand.u32 %s133, 1
          %s411 = scalar_lea.sflag [#allocation4], %s410
          %s412 = sand.u32 %s133, 1
          %s413 = smul.addr %s412, 8
          %s414 = scalar_lea.vmem [#allocation7], %s413
          %415 = dma.done %s411, 128
        $region60: #{tpu_custom_call.1} parent=55 // pred_fallthru
          _
      $region56: #{tpu_custom_call.1} parent=5 // pred_fallthru
        _
    $region6: #{tpu_custom_call.1} parent=1 // loop_footer
      %s20 = sadd.s32 1, %s16
    $region7: #{tpu_custom_call.1} parent=1 // loop_footer_branch
      %15 = sbr.rel target = $region3
    $region8: #{tpu_custom_call.1} parent=1 // loop_exit
      _
    %416 = vsyncpa [#allocation3], 1
    %s417 = scalar_lea.sflag [#allocation3], 1
    %418 = vsyncpa %s417, 1
    %419 = vsyncpa [#allocation6], 1
    %420 = vsyncpa [#allocation4], 1
    %s421 = scalar_lea.sflag [#allocation4], 1
    %422 = vsyncpa %s421, 1

</llo_original>
